<compile_context>
chip_gen: v6e
topology: v6e:2x2x1
jax: 0.10.0
libtpu: 0.0.40
codegen_flags: <defaults>
</compile_context>

<pallas_src>
from functools import partial

import jax
import jax.numpy as jnp
from jax import lax
from jax.experimental import pallas as pl
from jax.experimental.pallas import tpu as pltpu


def _round_up(n, m):
    return ((n + m - 1) // m) * m


# ----------------------------------------------------------------------------
# Single-buffer request for VMEM-resident (constant index_map) operands.
# ----------------------------------------------------------------------------
def _make_buffered1():
    try:
        mode = pl.Buffered(1)
        pl.BlockSpec((8, 128), lambda i: (0, 0), pipeline_mode=mode)
        return mode
    except Exception:
        return None


_BUFFERED1 = _make_buffered1()


def _resident_spec(shape, index_map):
    if _BUFFERED1 is not None:
        return pl.BlockSpec(shape, index_map, pipeline_mode=_BUFFERED1)
    return pl.BlockSpec(shape, index_map)


# ----------------------------------------------------------------------------
# Kernels
# ----------------------------------------------------------------------------
def _net1_resident_kernel(x_ref, w1_ref, b1_ref, wr1_ref, br1_ref,
                          wr2_ref, br2_ref, o_ref):
    """All weights VMEM-resident; one batch tile per grid step.

    x_ref   : (TB, Dp)      bf16
    w1_ref  : (Dp, Hp)      bf16    b1_ref : (1, Hp)     f32
    wr1_ref : (NB, Hp, Hp)  bf16    br1_ref: (NB, 1, Hp) f32
    wr2_ref : (NB, Hp, Hp)  bf16    br2_ref: (NB, 1, Hp) f32
    o_ref   : (TB, Hp)      out_dtype
    """
    num_blocks = wr1_ref.shape[0]

    # Linear(num_features, num_neurons) + ReLU + Dropout(eval)
    h = jnp.dot(x_ref[...], w1_ref[...], preferred_element_type=jnp.float32)
    h = jnp.maximum(h + b1_ref[...], 0.0)

    def block(i, h):
        identity = h  # skip_connection == nn.Identity()
        t = jnp.dot(h.astype(wr1_ref.dtype), wr1_ref[i],
                    preferred_element_type=jnp.float32) + br1_ref[i]
        t = jnp.maximum(t, 0.0)          # ReLU; Dropout(eval) = identity
        t = jnp.dot(t.astype(wr2_ref.dtype), wr2_ref[i],
                    preferred_element_type=jnp.float32) + br2_ref[i]
        return jnp.maximum(t + identity, 0.0)

    try:
        h = lax.fori_loop(0, num_blocks, block, h, unroll=True)
    except TypeError:  # older fori_loop without `unroll`
        h = lax.fori_loop(0, num_blocks, block, h)
    o_ref[...] = h.astype(o_ref.dtype)


def _net1_stream_kernel(x_ref, w1_ref, b1_ref, wr1_ref, br1_ref,
                        wr2_ref, br2_ref, o_ref, h_ref):
    """Weight-streaming fallback: grid=(batch_tiles, num_blocks).

    One residual block's weights are DMA'd per step; the activation h is
    carried in VMEM scratch across the (arbitrary) block axis.
    """
    j = pl.program_id(1)

    @pl.when(j == 0)
    def _():
        h0 = jnp.dot(x_ref[...], w1_ref[...], preferred_element_type=jnp.float32)
        h_ref[...] = jnp.maximum(h0 + b1_ref[...], 0.0)

    identity = h_ref[...]
    t = jnp.dot(identity.astype(wr1_ref.dtype), wr1_ref[0],
                preferred_element_type=jnp.float32) + br1_ref[0]
    t = jnp.maximum(t, 0.0)
    t = jnp.dot(t.astype(wr2_ref.dtype), wr2_ref[0],
                preferred_element_type=jnp.float32) + br2_ref[0]
    h_ref[...] = jnp.maximum(t + identity, 0.0)

    @pl.when(j == pl.num_programs(1) - 1)
    def _():
        o_ref[...] = h_ref[...].astype(o_ref.dtype)


# ----------------------------------------------------------------------------
# Wrapper
# ----------------------------------------------------------------------------
def prepare_params(params, *, lane=128):
    """Pad/cast the weights ONCE (hoisted out of the per-call path)."""
    w1, b1, wr1, br1, wr2, br2 = params
    d_in, hidden = w1.shape
    nb = wr1.shape[0]
    d_pad = _round_up(d_in, lane)
    h_pad = _round_up(max(hidden, lane), lane)
    bf16, f32 = jnp.bfloat16, jnp.float32

    w1p = jnp.zeros((d_pad, h_pad), bf16).at[:d_in, :hidden].set(w1.astype(bf16))
    b1p = jnp.zeros((1, h_pad), f32).at[:, :hidden].set(
        b1.astype(f32).reshape(1, hidden))
    wr1p = jnp.zeros((nb, h_pad, h_pad), bf16).at[:, :hidden, :hidden].set(
        wr1.astype(bf16))
    br1p = jnp.zeros((nb, 1, h_pad), f32).at[:, :, :hidden].set(
        br1.astype(f32).reshape(nb, 1, hidden))
    wr2p = jnp.zeros((nb, h_pad, h_pad), bf16).at[:, :hidden, :hidden].set(
        wr2.astype(bf16))
    br2p = jnp.zeros((nb, 1, h_pad), f32).at[:, :, :hidden].set(
        br2.astype(f32).reshape(nb, 1, hidden))

    padded = (w1p, b1p, wr1p, br1p, wr2p, br2p)
    dims = (int(d_in), int(hidden), int(d_pad), int(h_pad), int(nb))
    return padded, dims


def _pick_batch_tile(batch, h_pad, vmem_cap):
    """Batch tile: large (512-1024), multiple of 16, >=2 grid steps if possible."""
    b16 = _round_up(batch, 16)
    tb = min(1024, b16)
    # keep the f32 working set (h/identity/t + out tile) a small VMEM fraction
    while tb > 16 and 8 * tb * h_pad * 4 > vmem_cap // 4:
        tb //= 2
    tb = max(16, _round_up(tb, 16))
    b_pad = _round_up(batch, tb)
    # split so v7x's two TensorCores both get a tile (no effect on v5e/v6e)
    if b_pad // tb == 1 and b_pad >= 32:
        tb = _round_up(b_pad // 2, 16)
        b_pad = _round_up(batch, tb)
    return tb, b_pad


@partial(jax.jit, static_argnames=("dims", "force_stream", "out_dtype"))
def net1_forward(x, padded_params, *, dims, force_stream=False, out_dtype=None):
    """Net1 forward (eval mode). x: (batch, num_features)."""
    w1p, b1p, wr1p, br1p, wr2p, br2p = padded_params
    d_in, hidden, d_pad, h_pad, nb = dims
    batch = x.shape[0]
    if out_dtype is None:
        out_dtype = x.dtype
    out_bytes = jnp.dtype(out_dtype).itemsize
    bf16 = jnp.bfloat16

    try:
        vmem_cap = int(pltpu.get_tpu_info().vmem_capacity_bytes)
    except Exception:
        vmem_cap = 64 << 20  # conservative (v7x) default

    tb, b_pad = _pick_batch_tile(batch, h_pad, vmem_cap)
    grid_b = b_pad // tb

    # Per-call activation padding only (weights already padded once).
    xp = jnp.zeros((b_pad, d_pad), bf16).at[:batch, :d_in].set(x.astype(bf16))

    weight_mult = 1 if _BUFFERED1 is not None else 2  # single- vs double-buffered
    weight_bytes = ((d_pad * h_pad + 2 * nb * h_pad * h_pad) * 2
                    + (h_pad + 2 * nb * h_pad) * 4)
    tile_bytes = 2 * (tb * d_pad * 2 + tb * h_pad * out_bytes)   # x/out, 2-buffered
    work_bytes = 6 * tb * h_pad * 4                              # f32 temps
    resident_est = weight_mult * weight_bytes + tile_bytes + work_bytes + (4 << 20)
    use_resident = (nb == 0) or (
        (not force_stream) and resident_est < int(0.70 * vmem_cap))

    flops = 2 * b_pad * h_pad * (d_pad + 2 * nb * h_pad)
    bytes_accessed = weight_bytes + b_pad * d_pad * 2 + b_pad * h_pad * out_bytes
    try:
        cost = pl.CostEstimate(flops=flops, transcendentals=0,
                               bytes_accessed=bytes_accessed)
    except Exception:
        cost = None

    if use_resident:
        vmem_limit = int(min(max(resident_est + (8 << 20), 32 << 20),
                             int(0.90 * vmem_cap)))
        out = pl.pallas_call(
            _net1_resident_kernel,
            out_shape=jax.ShapeDtypeStruct((b_pad, h_pad), out_dtype),
            grid=(grid_b,),
            in_specs=[
                pl.BlockSpec((tb, d_pad), lambda i: (i, 0)),          # x (tiled)
                _resident_spec((d_pad, h_pad), lambda i: (0, 0)),     # w1
                _resident_spec((1, h_pad), lambda i: (0, 0)),         # b1
                _resident_spec((nb, h_pad, h_pad), lambda i: (0, 0, 0)),  # wr1
                _resident_spec((nb, 1, h_pad), lambda i: (0, 0, 0)),      # br1
                _resident_spec((nb, h_pad, h_pad), lambda i: (0, 0, 0)),  # wr2
                _resident_spec((nb, 1, h_pad), lambda i: (0, 0, 0)),      # br2
            ],
            out_specs=pl.BlockSpec((tb, h_pad), lambda i: (i, 0)),
            compiler_params=pltpu.CompilerParams(
                dimension_semantics=("parallel",),
                vmem_limit_bytes=vmem_limit),
            cost_estimate=cost,
        )(xp, w1p, b1p, wr1p, br1p, wr2p, br2p)
    else:
        # Weight-streaming path: one residual block's weights per grid step.
        per_block = 2 * (h_pad * h_pad * 2 + h_pad * 4)
        stream_est = (weight_mult * (d_pad * h_pad * 2 + h_pad * 4)
                      + 2 * per_block + tile_bytes
                      + 2 * tb * h_pad * 4 + work_bytes + (4 << 20))
        vmem_limit = int(min(max(stream_est + (8 << 20), 32 << 20),
                             int(0.90 * vmem_cap)))
        out = pl.pallas_call(
            _net1_stream_kernel,
            out_shape=jax.ShapeDtypeStruct((b_pad, h_pad), out_dtype),
            grid=(grid_b, nb),
            in_specs=[
                pl.BlockSpec((tb, d_pad), lambda i, j: (i, 0)),            # x
                _resident_spec((d_pad, h_pad), lambda i, j: (0, 0)),       # w1
                _resident_spec((1, h_pad), lambda i, j: (0, 0)),           # b1
                pl.BlockSpec((1, h_pad, h_pad), lambda i, j: (j, 0, 0)),   # wr1[j]
                pl.BlockSpec((1, 1, h_pad), lambda i, j: (j, 0, 0)),       # br1[j]
                pl.BlockSpec((1, h_pad, h_pad), lambda i, j: (j, 0, 0)),   # wr2[j]
                pl.BlockSpec((1, 1, h_pad), lambda i, j: (j, 0, 0)),       # br2[j]
            ],
            out_specs=pl.BlockSpec((tb, h_pad), lambda i, j: (i, 0)),
            scratch_shapes=[pltpu.VMEM((tb, h_pad), jnp.float32)],  # h carry
            compiler_params=pltpu.CompilerParams(
                dimension_semantics=("parallel", "arbitrary"),
                vmem_limit_bytes=vmem_limit),
            cost_estimate=cost,
        )(xp, w1p, b1p, wr1p, br1p, wr2p, br2p)

    return out[:batch, :hidden]


# ----------------------------------------------------------------------------
# Synthetic params + references
# ----------------------------------------------------------------------------
def init_params(key, num_features, num_neurons, num_residual_blocks):
    """Deterministic synthetic parameters (shapes match Net1.__init__)."""
    ks = jax.random.split(key, 6)
    s = 0.1
    w1 = s * jax.random.normal(ks[0], (num_features, num_neurons), jnp.float32)
    b1 = s * jax.random.normal(ks[1], (1, num_neurons), jnp.float32)
    wr1 = s * jax.random.normal(ks[2], (num_residual_blocks, num_neurons, num_neurons), jnp.float32)
    br1 = s * jax.random.normal(ks[3], (num_residual_blocks, 1, num_neurons), jnp.float32)
    wr2 = s * jax.random.normal(ks[4], (num_residual_blocks, num_neurons, num_neurons), jnp.float32)
    br2 = s * jax.random.normal(ks[5], (num_residual_blocks, 1, num_neurons), jnp.float32)
    return (w1, b1, wr1, br1, wr2, br2)


def reference_forward_f32(x, params):
    """Pure-JAX f32 reference (mirrors the PyTorch forward in eval mode)."""
    w1, b1, wr1, br1, wr2, br2 = params
    h = jnp.maximum(x @ w1 + b1, 0.0)
    for i in range(wr1.shape[0]):
        identity = h
        t = jnp.maximum(h @ wr1[i] + br1[i], 0.0)
        t = t @ wr2[i] + br2[i]
        h = jnp.maximum(t + identity, 0.0)
    return h


def reference_forward_bf16(x, params):
    """Reference matching the kernel's mixed precision (bf16 operands, f32 acc)."""
    w1, b1, wr1, br1, wr2, br2 = params
    dot = lambda a, w: jnp.dot(a.astype(jnp.bfloat16), w.astype(jnp.bfloat16),
                               preferred_element_type=jnp.float32)
    h = jnp.maximum(dot(x, w1) + b1, 0.0)
    for i in range(wr1.shape[0]):
        identity = h
        t = jnp.maximum(dot(h, wr1[i]) + br1[i], 0.0)
        t = dot(t, wr2[i]) + br2[i]
        h = jnp.maximum(t + identity, 0.0)
    return h


if __name__ == "__main__":
    # Small shapes consistent with Net1(num_features, num_residual_blocks,
    # num_neurons, dropout_p); dropout_p is irrelevant in eval mode.
    # TODO(synk): dropout is implemented as identity (inference mode only).
    batch = 8
    num_features = 8
    num_neurons = 32
    num_residual_blocks = 2

    key = jax.random.PRNGKey(0)
    kx, kp = jax.random.split(key)
    x = jax.random.normal(kx, (batch, num_features), jnp.float32)
    params = init_params(kp, num_features, num_neurons, num_residual_blocks)

    # Pad/cast the weights once (hoisted out of the per-call path).
    padded, dims = prepare_params(params)

    out = jax.block_until_ready(net1_forward(x, padded, dims=dims))
    assert out.shape == (batch, num_neurons)

    ref16 = reference_forward_bf16(x, params)
    ref32 = reference_forward_f32(x, params)
    assert jnp.allclose(out, ref16, atol=2e-3, rtol=2e-3), "mismatch vs bf16-matched reference"
    assert jnp.allclose(out, ref32, atol=5e-2, rtol=5e-2), "mismatch vs f32 reference"

    # Also exercise the weight-streaming fallback path (used automatically when
    # the residual weight stack would not fit VMEM, e.g. large nb on v7x).
    out_s = jax.block_until_ready(
        net1_forward(x, padded, dims=dims, force_stream=True))
    assert jnp.allclose(out_s, ref16, atol=2e-3, rtol=2e-3), "streaming path mismatch"

    print("KERNEL_OK")
</pallas_src>

<mosaic_0001>
module attributes {stable_mosaic.version = 11 : i64} {
  func.func @_net1_resident_kernel(%arg0: i32, %arg1: memref<16x128xbf16, #tpu.memory_space<vmem>>, %arg2: memref<128x128xbf16, #tpu.memory_space<vmem>>, %arg3: memref<1x128xf32, #tpu.memory_space<vmem>>, %arg4: memref<2x128x128xbf16, #tpu.memory_space<vmem>>, %arg5: memref<2x1x128xf32, #tpu.memory_space<vmem>>, %arg6: memref<2x128x128xbf16, #tpu.memory_space<vmem>>, %arg7: memref<2x1x128xf32, #tpu.memory_space<vmem>>, %arg8: memref<16x128xf32, #tpu.memory_space<vmem>>) attributes {dimension_semantics = [#tpu.dimension_semantics<parallel>], iteration_bounds = array<i64: 1>, scalar_prefetch = 0 : i64, scratch_operands = 0 : i64, tpu.core_type = #tpu.core_type<tc>, window_params = [{transform_indices = @transform_0, window_bounds = array<i64: 16, 128>}, {pipeline_mode = #tpu.pipeline_mode<synchronous>, transform_indices = @transform_1, window_bounds = array<i64: 128, 128>}, {pipeline_mode = #tpu.pipeline_mode<synchronous>, transform_indices = @transform_2, window_bounds = array<i64: 1, 128>}, {pipeline_mode = #tpu.pipeline_mode<synchronous>, transform_indices = @transform_3, window_bounds = array<i64: 2, 128, 128>}, {pipeline_mode = #tpu.pipeline_mode<synchronous>, transform_indices = @transform_4, window_bounds = array<i64: 2, 1, 128>}, {pipeline_mode = #tpu.pipeline_mode<synchronous>, transform_indices = @transform_5, window_bounds = array<i64: 2, 128, 128>}, {pipeline_mode = #tpu.pipeline_mode<synchronous>, transform_indices = @transform_6, window_bounds = array<i64: 2, 1, 128>}, {transform_indices = @transform_7, window_bounds = array<i64: 16, 128>}]} {
    %c0 = arith.constant 0 : index
    %c0_0 = arith.constant 0 : index
    %0 = vector.load %arg1[%c0, %c0_0] : memref<16x128xbf16, #tpu.memory_space<vmem>>, vector<16x128xbf16>
    %c0_1 = arith.constant 0 : index
    %c0_2 = arith.constant 0 : index
    %1 = vector.load %arg2[%c0_1, %c0_2] : memref<128x128xbf16, #tpu.memory_space<vmem>>, vector<128x128xbf16>
    %cst = arith.constant dense<0.000000e+00> : vector<16x128xf32>
    %2 = tpu.matmul %0, %1, %cst {dimension_numbers = #tpu.dot_dimension_numbers<[1], [0], [0], [1], [0, 0, 1, 1], [], []>} : vector<16x128xbf16>, vector<128x128xbf16>, vector<16x128xf32> -> vector<16x128xf32>
    %c0_3 = arith.constant 0 : index
    %c0_4 = arith.constant 0 : index
    %3 = vector.load %arg3[%c0_3, %c0_4] : memref<1x128xf32, #tpu.memory_space<vmem>>, vector<1x128xf32>
    %4 = vector.broadcast %3 : vector<1x128xf32> to vector<16x128xf32>
    %5 = arith.addf %2, %4 : vector<16x128xf32>
    %cst_5 = arith.constant 0.000000e+00 : f32
    %6 = vector.broadcast %cst_5 : f32 to vector<16x128xf32>
    %7 = arith.maximumf %5, %6 : vector<16x128xf32>
    %c0_i32 = arith.constant 0 : i32
    %8 = arith.truncf %7 : vector<16x128xf32> to vector<16x128xbf16>
    %9 = arith.index_cast %c0_i32 : i32 to index
    %c0_6 = arith.constant 0 : index
    %c0_7 = arith.constant 0 : index
    %10 = vector.load %arg4[%9, %c0_6, %c0_7] : memref<2x128x128xbf16, #tpu.memory_space<vmem>>, vector<1x128x128xbf16>
    %11 = vector.shape_cast %10 : vector<1x128x128xbf16> to vector<128x128xbf16>
    %cst_8 = arith.constant dense<0.000000e+00> : vector<16x128xf32>
    %12 = tpu.matmul %8, %11, %cst_8 {dimension_numbers = #tpu.dot_dimension_numbers<[1], [0], [0], [1], [0, 0, 1, 1], [], []>} : vector<16x128xbf16>, vector<128x128xbf16>, vector<16x128xf32> -> vector<16x128xf32>
    %13 = arith.index_cast %c0_i32 : i32 to index
    %c0_9 = arith.constant 0 : index
    %c0_10 = arith.constant 0 : index
    %14 = vector.load %arg5[%13, %c0_9, %c0_10] : memref<2x1x128xf32, #tpu.memory_space<vmem>>, vector<1x1x128xf32>
    %15 = vector.shape_cast %14 : vector<1x1x128xf32> to vector<1x128xf32>
    %16 = vector.broadcast %15 : vector<1x128xf32> to vector<16x128xf32>
    %17 = arith.addf %12, %16 : vector<16x128xf32>
    %cst_11 = arith.constant 0.000000e+00 : f32
    %18 = vector.broadcast %cst_11 : f32 to vector<16x128xf32>
    %19 = arith.maximumf %17, %18 : vector<16x128xf32>
    %20 = arith.truncf %19 : vector<16x128xf32> to vector<16x128xbf16>
    %21 = arith.index_cast %c0_i32 : i32 to index
    %c0_12 = arith.constant 0 : index
    %c0_13 = arith.constant 0 : index
    %22 = vector.load %arg6[%21, %c0_12, %c0_13] : memref<2x128x128xbf16, #tpu.memory_space<vmem>>, vector<1x128x128xbf16>
    %23 = vector.shape_cast %22 : vector<1x128x128xbf16> to vector<128x128xbf16>
    %cst_14 = arith.constant dense<0.000000e+00> : vector<16x128xf32>
    %24 = tpu.matmul %20, %23, %cst_14 {dimension_numbers = #tpu.dot_dimension_numbers<[1], [0], [0], [1], [0, 0, 1, 1], [], []>} : vector<16x128xbf16>, vector<128x128xbf16>, vector<16x128xf32> -> vector<16x128xf32>
    %25 = arith.index_cast %c0_i32 : i32 to index
    %c0_15 = arith.constant 0 : index
    %c0_16 = arith.constant 0 : index
    %26 = vector.load %arg7[%25, %c0_15, %c0_16] : memref<2x1x128xf32, #tpu.memory_space<vmem>>, vector<1x1x128xf32>
    %27 = vector.shape_cast %26 : vector<1x1x128xf32> to vector<1x128xf32>
    %28 = vector.broadcast %27 : vector<1x128xf32> to vector<16x128xf32>
    %29 = arith.addf %24, %28 : vector<16x128xf32>
    %30 = arith.addf %29, %7 : vector<16x128xf32>
    %cst_17 = arith.constant 0.000000e+00 : f32
    %31 = vector.broadcast %cst_17 : f32 to vector<16x128xf32>
    %32 = arith.maximumf %30, %31 : vector<16x128xf32>
    %c1_i32 = arith.constant 1 : i32
    %33 = arith.truncf %32 : vector<16x128xf32> to vector<16x128xbf16>
    %34 = arith.index_cast %c1_i32 : i32 to index
    %c0_18 = arith.constant 0 : index
    %c0_19 = arith.constant 0 : index
    %35 = vector.load %arg4[%34, %c0_18, %c0_19] : memref<2x128x128xbf16, #tpu.memory_space<vmem>>, vector<1x128x128xbf16>
    %36 = vector.shape_cast %35 : vector<1x128x128xbf16> to vector<128x128xbf16>
    %cst_20 = arith.constant dense<0.000000e+00> : vector<16x128xf32>
    %37 = tpu.matmul %33, %36, %cst_20 {dimension_numbers = #tpu.dot_dimension_numbers<[1], [0], [0], [1], [0, 0, 1, 1], [], []>} : vector<16x128xbf16>, vector<128x128xbf16>, vector<16x128xf32> -> vector<16x128xf32>
    %38 = arith.index_cast %c1_i32 : i32 to index
    %c0_21 = arith.constant 0 : index
    %c0_22 = arith.constant 0 : index
    %39 = vector.load %arg5[%38, %c0_21, %c0_22] : memref<2x1x128xf32, #tpu.memory_space<vmem>>, vector<1x1x128xf32>
    %40 = vector.shape_cast %39 : vector<1x1x128xf32> to vector<1x128xf32>
    %41 = vector.broadcast %40 : vector<1x128xf32> to vector<16x128xf32>
    %42 = arith.addf %37, %41 : vector<16x128xf32>
    %cst_23 = arith.constant 0.000000e+00 : f32
    %43 = vector.broadcast %cst_23 : f32 to vector<16x128xf32>
    %44 = arith.maximumf %42, %43 : vector<16x128xf32>
    %45 = arith.truncf %44 : vector<16x128xf32> to vector<16x128xbf16>
    %46 = arith.index_cast %c1_i32 : i32 to index
    %c0_24 = arith.constant 0 : index
    %c0_25 = arith.constant 0 : index
    %47 = vector.load %arg6[%46, %c0_24, %c0_25] : memref<2x128x128xbf16, #tpu.memory_space<vmem>>, vector<1x128x128xbf16>
    %48 = vector.shape_cast %47 : vector<1x128x128xbf16> to vector<128x128xbf16>
    %cst_26 = arith.constant dense<0.000000e+00> : vector<16x128xf32>
    %49 = tpu.matmul %45, %48, %cst_26 {dimension_numbers = #tpu.dot_dimension_numbers<[1], [0], [0], [1], [0, 0, 1, 1], [], []>} : vector<16x128xbf16>, vector<128x128xbf16>, vector<16x128xf32> -> vector<16x128xf32>
    %50 = arith.index_cast %c1_i32 : i32 to index
    %c0_27 = arith.constant 0 : index
    %c0_28 = arith.constant 0 : index
    %51 = vector.load %arg7[%50, %c0_27, %c0_28] : memref<2x1x128xf32, #tpu.memory_space<vmem>>, vector<1x1x128xf32>
    %52 = vector.shape_cast %51 : vector<1x1x128xf32> to vector<1x128xf32>
    %53 = vector.broadcast %52 : vector<1x128xf32> to vector<16x128xf32>
    %54 = arith.addf %49, %53 : vector<16x128xf32>
    %55 = arith.addf %54, %32 : vector<16x128xf32>
    %cst_29 = arith.constant 0.000000e+00 : f32
    %56 = vector.broadcast %cst_29 : f32 to vector<16x128xf32>
    %57 = arith.maximumf %55, %56 : vector<16x128xf32>
    %c2_i32 = arith.constant 2 : i32
    %c0_30 = arith.constant 0 : index
    %c0_31 = arith.constant 0 : index
    %58 = vector.load %arg8[%c0_30, %c0_31] : memref<16x128xf32, #tpu.memory_space<vmem>>, vector<16x128xf32>
    tpu.vector_store %arg8[%c0_30, %c0_31], %57 {strides = array<i32>} : memref<16x128xf32, #tpu.memory_space<vmem>>, vector<16x128xf32>,
    return
  }
  func.func @transform_0(%arg0: i32) -> (i32, i32) {
    %c0_i32 = arith.constant 0 : i32
    %c0_i32_0 = arith.constant 0 : i32
    return %arg0, %c0_i32 : i32, i32
  }
  func.func @transform_1(%arg0: i32) -> (i32, i32) {
    %c0_i32 = arith.constant 0 : i32
    %c0_i32_0 = arith.constant 0 : i32
    %c0_i32_1 = arith.constant 0 : i32
    return %c0_i32, %c0_i32_0 : i32, i32
  }
  func.func @transform_2(%arg0: i32) -> (i32, i32) {
    %c0_i32 = arith.constant 0 : i32
    %c0_i32_0 = arith.constant 0 : i32
    %c0_i32_1 = arith.constant 0 : i32
    return %c0_i32, %c0_i32_0 : i32, i32
  }
  func.func @transform_3(%arg0: i32) -> (i32, i32, i32) {
    %c0_i32 = arith.constant 0 : i32
    %c0_i32_0 = arith.constant 0 : i32
    %c0_i32_1 = arith.constant 0 : i32
    %c0_i32_2 = arith.constant 0 : i32
    return %c0_i32, %c0_i32_0, %c0_i32_1 : i32, i32, i32
  }
  func.func @transform_4(%arg0: i32) -> (i32, i32, i32) {
    %c0_i32 = arith.constant 0 : i32
    %c0_i32_0 = arith.constant 0 : i32
    %c0_i32_1 = arith.constant 0 : i32
    %c0_i32_2 = arith.constant 0 : i32
    return %c0_i32, %c0_i32_0, %c0_i32_1 : i32, i32, i32
  }
  func.func @transform_5(%arg0: i32) -> (i32, i32, i32) {
    %c0_i32 = arith.constant 0 : i32
    %c0_i32_0 = arith.constant 0 : i32
    %c0_i32_1 = arith.constant 0 : i32
    %c0_i32_2 = arith.constant 0 : i32
    return %c0_i32, %c0_i32_0, %c0_i32_1 : i32, i32, i32
  }
  func.func @transform_6(%arg0: i32) -> (i32, i32, i32) {
    %c0_i32 = arith.constant 0 : i32
    %c0_i32_0 = arith.constant 0 : i32
    %c0_i32_1 = arith.constant 0 : i32
    %c0_i32_2 = arith.constant 0 : i32
    return %c0_i32, %c0_i32_0, %c0_i32_1 : i32, i32, i32
  }
  func.func @transform_7(%arg0: i32) -> (i32, i32) {
    %c0_i32 = arith.constant 0 : i32
    %c0_i32_0 = arith.constant 0 : i32
    return %arg0, %c0_i32 : i32, i32
  }
}

</mosaic_0001>

<llo_original>
// kernel: net1_forward.1
$region0: #{net1_forward.1}
  #allocation0 [shape = 'u32[]', space=smem, size = 0x4, offset = 0x4, fixed_abs, tag = 'smem constant byte address 0x4 - core index']
  #allocation1 [shape = 'u32[144,128]{1,0:T(1,128)}', space=vmem, size = 0x12000, scoped, tag = 'internal scratch']
  %s0 = inlined_call_operand.vmem [shape: bf16[16,128], index: 0, kind: input, shape index: {}]
  %s1 = inlined_call_operand.hbm [shape: bf16[128,128], index: 1, kind: input, shape index: {}]
  %s2 = inlined_call_operand.vmem [shape: f32[1,128], index: 2, kind: input, shape index: {}]
  %s3 = inlined_call_operand.hbm [shape: bf16[2,128,128], index: 3, kind: input, shape index: {}]
  %s4 = inlined_call_operand.vmem [shape: f32[2,1,128], index: 4, kind: input, shape index: {}]
  %s5 = inlined_call_operand.hbm [shape: bf16[2,128,128], index: 5, kind: input, shape index: {}]
  %s6 = inlined_call_operand.vmem [shape: f32[2,1,128], index: 6, kind: input, shape index: {}]
  %s7 = inlined_call_operand.vmem [shape: f32[16,128], index: 7, kind: output, shape index: {}]
  %s8 = sld [smem:[#allocation0]]
  $region50: #{net1_forward.1} parent=0
    _
  %s10 = ssub.s32 1, %s8
  %s11 = scalar_select 0, %s10, %s8
  $region1: #{net1_forward.1} parent=0
    #allocation2 [shape = 'u8[32768]{0}', space=vmem, size = 0x8000, scoped, tag = 'input window, operand 1, single buffered']
    #allocation3 [shape = 's32[1]{0}', space=sflag, size = 0x4, scoped, tag = 'scoped memory for net1_forward.1']
    #allocation4 [shape = 'u8[65536]{0}', space=vmem, size = 0x10000, scoped, tag = 'input window, operand 3, single buffered']
    #allocation5 [shape = 's32[1]{0}', space=sflag, size = 0x4, scoped, tag = 'scoped memory for net1_forward.1']
    #allocation6 [shape = 'u8[65536]{0}', space=vmem, size = 0x10000, scoped, tag = 'input window, operand 5, single buffered']
    %12 = vsyncpa [#allocation3], 0
    %13 = vsyncpa [#allocation5], 0
    // Predicated region
    $region2: #{net1_forward.1} parent=1 // pred_check
      _
    $region3: #{net1_forward.1} parent=1 // pred_check_branch
      %15 = sbr.rel (0) target = $region5
    $region4: #{net1_forward.1} parent=1 // pred_region
      _
    $region5: #{net1_forward.1} parent=1 // pred_fallthru
      _
    // Predicated region
    $region6: #{net1_forward.1} parent=1 // pred_check
      _
    $region7: #{net1_forward.1} parent=1 // pred_check_branch
      %17 = sbr.rel (0) target = $region9
    $region8: #{net1_forward.1} parent=1 // pred_region
      %s19 = ssub.s32 1024, 1024
      %20 = vsyncadd [#allocation3], %s19
      %s21 = sshll.u32 [#allocation2], 4
      %s22 = int_to_ptr.vmem [resolvable:$true] %s21
      %27 = dma.hbm_to_vmem [thread:$0]  %s1, 1024, %s22, [#allocation3], 64, 64, 4
    $region9: #{net1_forward.1} parent=1 // pred_fallthru
      _
    // Predicated region
    $region10: #{net1_forward.1} parent=1 // pred_check
      _
    $region11: #{net1_forward.1} parent=1 // pred_check_branch
      %29 = sbr.rel (0) target = $region13
    $region12: #{net1_forward.1} parent=1 // pred_region
      _
    $region13: #{net1_forward.1} parent=1 // pred_fallthru
      _
    // Predicated region
    $region14: #{net1_forward.1} parent=1 // pred_check
      _
    $region15: #{net1_forward.1} parent=1 // pred_check_branch
      %31 = sbr.rel (0) target = $region17
    $region16: #{net1_forward.1} parent=1 // pred_region
      %s33 = ssub.s32 2048, 2048
      %34 = vsyncadd [#allocation5], %s33
      %s35 = sshll.u32 [#allocation4], 4
      %s36 = int_to_ptr.vmem [resolvable:$true] %s35
      %41 = dma.hbm_to_vmem [thread:$0]  %s3, 2048, %s36, [#allocation5], 64, 64, 4
    $region17: #{net1_forward.1} parent=1 // pred_fallthru
      _
    // Predicated region
    $region18: #{net1_forward.1} parent=1 // pred_check
      _
    $region19: #{net1_forward.1} parent=1 // pred_check_branch
      %43 = sbr.rel (0) target = $region21
    $region20: #{net1_forward.1} parent=1 // pred_region
      _
    $region21: #{net1_forward.1} parent=1 // pred_fallthru
      _
    // Predicated region
    $region22: #{net1_forward.1} parent=1 // pred_check
      _
    $region23: #{net1_forward.1} parent=1 // pred_check_branch
      %45 = sbr.rel (0) target = $region25
    $region24: #{net1_forward.1} parent=1 // pred_region
      %s47 = ssub.s32 2048, 2048
      %48 = vsyncadd [#allocation5], %s47
      %s49 = sshll.u32 [#allocation6], 4
      %s50 = int_to_ptr.vmem [resolvable:$true] %s49
      %55 = dma.hbm_to_vmem [thread:$0]  %s5, 2048, %s50, [#allocation5], 64, 64, 4
    $region25: #{net1_forward.1} parent=1 // pred_fallthru
      _
    // Predicated region
    $region26: #{net1_forward.1} parent=1 // pred_check
      _
    $region27: #{net1_forward.1} parent=1 // pred_check_branch
      %57 = sbr.rel (0) target = $region29
    $region28: #{net1_forward.1} parent=1 // pred_region
      _
    $region29: #{net1_forward.1} parent=1 // pred_fallthru
      _
    // Predicated region
    $region30: #{net1_forward.1} parent=1 // pred_check
      _
    $region31: #{net1_forward.1} parent=1 // pred_check_branch
      %59 = sbr.rel (0) target = $region33
    $region32: #{net1_forward.1} parent=1 // pred_region
      %60 = dma.done [#allocation3], 1024
    $region33: #{net1_forward.1} parent=1 // pred_fallthru
      _
    // Predicated region
    $region34: #{net1_forward.1} parent=1 // pred_check
      _
    $region35: #{net1_forward.1} parent=1 // pred_check_branch
      %62 = sbr.rel (0) target = $region37
    $region36: #{net1_forward.1} parent=1 // pred_region
      %63 = dma.done [#allocation5], 2048
    $region37: #{net1_forward.1} parent=1 // pred_fallthru
      _
    // Predicated region
    $region38: #{net1_forward.1} parent=1 // pred_check
      _
    $region39: #{net1_forward.1} parent=1 // pred_check_branch
      %65 = sbr.rel (0) target = $region41
    $region40: #{net1_forward.1} parent=1 // pred_region
      %66 = dma.done [#allocation5], 2048
    $region41: #{net1_forward.1} parent=1 // pred_fallthru
      _
    %v68 = vld [vmem:[%s0] sm:$0xf]
    %v69 = vld [vmem:[%s0 + $0x4] sm:$0xf]
    %v70 = vld [vmem:[#allocation2] sm:$0xf]
    %v71 = vld [vmem:[#allocation2 + $0x4] sm:$0xf]
    %v72 = vld [vmem:[#allocation2 + $0x8] sm:$0xf]
    %v73 = vld [vmem:[#allocation2 + $0xc] sm:$0xf]
    %v74 = vld [vmem:[#allocation2 + $0x10] sm:$0xf]
    %v75 = vld [vmem:[#allocation2 + $0x14] sm:$0xf]
    %v76 = vld [vmem:[#allocation2 + $0x18] sm:$0xf]
    %v77 = vld [vmem:[#allocation2 + $0x1c] sm:$0xf]
    %v78 = vld [vmem:[#allocation2 + $0x20] sm:$0xf]
    %v79 = vld [vmem:[#allocation2 + $0x24] sm:$0xf]
    %v80 = vld [vmem:[#allocation2 + $0x28] sm:$0xf]
    %v81 = vld [vmem:[#allocation2 + $0x2c] sm:$0xf]
    %v82 = vld [vmem:[#allocation2 + $0x30] sm:$0xf]
    %v83 = vld [vmem:[#allocation2 + $0x34] sm:$0xf]
    %v84 = vld [vmem:[#allocation2 + $0x38] sm:$0xf]
    %v85 = vld [vmem:[#allocation2 + $0x3c] sm:$0xf]
    %v86 = vld [vmem:[%s2] sm:$0x1]
    %v88 = vlaneseq
    %v89 = vshrl.u32 %v88, 7
    %v90 = vsub.s32 0, %v89
    %v91 = vrot.slane %v86, %v90
    %v95 = vunpack.c.l.b16 %v68
    %v96 = vunpack.c.l.b16 %v69
    %v97 = vpack.c.b16 %v96, %v95
    %v115 = vunpack.c.l.b16 %v70
    %v116 = vunpack.c.l.b16 %v71
    %v117 = vunpack.c.l.b16 %v72
    %v118 = vunpack.c.l.b16 %v73
    %v119 = vunpack.c.l.b16 %v74
    %v120 = vunpack.c.l.b16 %v75
    %v121 = vunpack.c.l.b16 %v76
    %v122 = vunpack.c.l.b16 %v77
    %v123 = vunpack.c.l.b16 %v78
    %v124 = vunpack.c.l.b16 %v79
    %v125 = vunpack.c.l.b16 %v80
    %v126 = vunpack.c.l.b16 %v81
    %v127 = vunpack.c.l.b16 %v82
    %v128 = vunpack.c.l.b16 %v83
    %v129 = vunpack.c.l.b16 %v84
    %v130 = vunpack.c.l.b16 %v85
    %v131 = vpack.c.b16 %v116, %v115
    %v132 = vpack.c.b16 %v118, %v117
    %v133 = vpack.c.b16 %v120, %v119
    %v134 = vpack.c.b16 %v122, %v121
    %v135 = vpack.c.b16 %v124, %v123
    %v136 = vpack.c.b16 %v126, %v125
    %v137 = vpack.c.b16 %v128, %v127
    %v138 = vpack.c.b16 %v130, %v129
    %147 = vmatprep.subr.bf16.mxu0 0
    %148 = vmatpush1.bf16.msra.mxu0 %v138
    %149 = vmatprep.subr.bf16.mxu0 0
    %150 = vmatpush1.bf16.msra.mxu0 %v137
    %151 = vmatprep.subr.bf16.mxu0 0
    %152 = vmatpush1.bf16.msra.mxu0 %v136
    %153 = vmatprep.subr.bf16.mxu0 0
    %154 = vmatpush1.bf16.msra.mxu0 %v135
    %155 = vmatprep.subr.bf16.mxu0 0
    %156 = vmatpush1.bf16.msra.mxu0 %v134
    %157 = vmatprep.subr.bf16.mxu0 0
    %158 = vmatpush1.bf16.msra.mxu0 %v133
    %159 = vmatprep.subr.bf16.mxu0 0
    %160 = vmatpush1.bf16.msra.mxu0 %v132
    %161 = vmatprep.subr.bf16.mxu0 0
    %162 = vmatpush1.bf16.msra.mxu0 %v131
    %163 = vmatprep.subr.bf16.mxu0 0
    %164 = vmatpush2.bf16.msra.mxu0 0
    %165 = vmatprep.subr.bf16.mxu0 0
    %166 = vmatpush2.bf16.msra.mxu0 0
    %167 = vmatprep.subr.bf16.mxu0 0
    %168 = vmatpush2.bf16.msra.mxu0 0
    %169 = vmatprep.subr.bf16.mxu0 0
    %170 = vmatpush2.bf16.msra.mxu0 0
    %171 = vmatprep.subr.bf16.mxu0 0
    %172 = vmatpush2.bf16.msra.mxu0 0
    %173 = vmatprep.subr.bf16.mxu0 0
    %174 = vmatpush2.bf16.msra.mxu0 0
    %175 = vmatprep.subr.bf16.mxu0 0
    %176 = vmatpush2.bf16.msra.mxu0 0
    %177 = vmatprep.subr.bf16.mxu0 0
    %178 = vmatpush2.bf16.msra.mxu0 0
    %179 = vmatprep.mubr.bf16.mxu0 0
    %180 = vmatmul.mubr.bf16.gmra.mxu0 %v97
    %v181 = vpop.f32.mrf.mxu0
    %v182 = vadd.f32 %v91, %v181
    %v183 = vpop.f32.mrf.mxu0
    %v184 = vpop.f32.mrf.mxu0
    %v185 = vadd.f32 %v91, %v184
    %v186 = vpop.f32.mrf.mxu0
    %187 = vdwg.mxu0
    %v188 = vmax.f32 %v182, 0.0
    %v189 = vmax.f32 %v185, 0.0
    %v190 = vpack.c.bf16 %v189, %v188
    %v191 = vld [vmem:[#allocation4] sm:$0xf]
    %v192 = vld [vmem:[#allocation4 + $0x4] sm:$0xf]
    %v193 = vld [vmem:[#allocation4 + $0x8] sm:$0xf]
    %v194 = vld [vmem:[#allocation4 + $0xc] sm:$0xf]
    %v195 = vld [vmem:[#allocation4 + $0x10] sm:$0xf]
    %v196 = vld [vmem:[#allocation4 + $0x14] sm:$0xf]
    %v197 = vld [vmem:[#allocation4 + $0x18] sm:$0xf]
    %v198 = vld [vmem:[#allocation4 + $0x1c] sm:$0xf]
    %v199 = vld [vmem:[#allocation4 + $0x20] sm:$0xf]
    %v200 = vld [vmem:[#allocation4 + $0x24] sm:$0xf]
    %v201 = vld [vmem:[#allocation4 + $0x28] sm:$0xf]
    %v202 = vld [vmem:[#allocation4 + $0x2c] sm:$0xf]
    %v203 = vld [vmem:[#allocation4 + $0x30] sm:$0xf]
    %v204 = vld [vmem:[#allocation4 + $0x34] sm:$0xf]
    %v205 = vld [vmem:[#allocation4 + $0x38] sm:$0xf]
    %v206 = vld [vmem:[#allocation4 + $0x3c] sm:$0xf]
    %v207 = vld [vmem:[%s4] sm:$0x1]
    %v209 = vlaneseq
    %v210 = vshrl.u32 %v209, 7
    %v211 = vsub.s32 0, %v210
    %v212 = vrot.slane %v207, %v211
    %v230 = vunpack.c.l.b16 %v191
    %v231 = vunpack.c.l.b16 %v192
    %v232 = vunpack.c.l.b16 %v193
    %v233 = vunpack.c.l.b16 %v194
    %v234 = vunpack.c.l.b16 %v195
    %v235 = vunpack.c.l.b16 %v196
    %v236 = vunpack.c.l.b16 %v197
    %v237 = vunpack.c.l.b16 %v198
    %v238 = vunpack.c.l.b16 %v199
    %v239 = vunpack.c.l.b16 %v200
    %v240 = vunpack.c.l.b16 %v201
    %v241 = vunpack.c.l.b16 %v202
    %v242 = vunpack.c.l.b16 %v203
    %v243 = vunpack.c.l.b16 %v204
    %v244 = vunpack.c.l.b16 %v205
    %v245 = vunpack.c.l.b16 %v206
    %v246 = vpack.c.b16 %v231, %v230
    %v247 = vpack.c.b16 %v233, %v232
    %v248 = vpack.c.b16 %v235, %v234
    %v249 = vpack.c.b16 %v237, %v236
    %v250 = vpack.c.b16 %v239, %v238
    %v251 = vpack.c.b16 %v241, %v240
    %v252 = vpack.c.b16 %v243, %v242
    %v253 = vpack.c.b16 %v245, %v244
    %262 = vmatprep.subr.bf16.mxu0 0
    %263 = vmatpush1.bf16.msra.mxu0 %v253
    %264 = vmatprep.subr.bf16.mxu0 0
    %265 = vmatpush1.bf16.msra.mxu0 %v252
    %266 = vmatprep.subr.bf16.mxu0 0
    %267 = vmatpush1.bf16.msra.mxu0 %v251
    %268 = vmatprep.subr.bf16.mxu0 0
    %269 = vmatpush1.bf16.msra.mxu0 %v250
    %270 = vmatprep.subr.bf16.mxu0 0
    %271 = vmatpush1.bf16.msra.mxu0 %v249
    %272 = vmatprep.subr.bf16.mxu0 0
    %273 = vmatpush1.bf16.msra.mxu0 %v248
    %274 = vmatprep.subr.bf16.mxu0 0
    %275 = vmatpush1.bf16.msra.mxu0 %v247
    %276 = vmatprep.subr.bf16.mxu0 0
    %277 = vmatpush1.bf16.msra.mxu0 %v246
    %278 = vmatprep.subr.bf16.mxu0 0
    %279 = vmatpush2.bf16.msra.mxu0 0
    %280 = vmatprep.subr.bf16.mxu0 0
    %281 = vmatpush2.bf16.msra.mxu0 0
    %282 = vmatprep.subr.bf16.mxu0 0
    %283 = vmatpush2.bf16.msra.mxu0 0
    %284 = vmatprep.subr.bf16.mxu0 0
    %285 = vmatpush2.bf16.msra.mxu0 0
    %286 = vmatprep.subr.bf16.mxu0 0
    %287 = vmatpush2.bf16.msra.mxu0 0
    %288 = vmatprep.subr.bf16.mxu0 0
    %289 = vmatpush2.bf16.msra.mxu0 0
    %290 = vmatprep.subr.bf16.mxu0 0
    %291 = vmatpush2.bf16.msra.mxu0 0
    %292 = vmatprep.subr.bf16.mxu0 0
    %293 = vmatpush2.bf16.msra.mxu0 0
    %294 = vmatprep.mubr.bf16.mxu0 0
    %295 = vmatmul.mubr.bf16.gmra.mxu0 %v190
    %v296 = vpop.f32.mrf.mxu0
    %v297 = vadd.f32 %v212, %v296
    %v298 = vpop.f32.mrf.mxu0
    %v299 = vpop.f32.mrf.mxu0
    %v300 = vadd.f32 %v212, %v299
    %v301 = vpop.f32.mrf.mxu0
    %302 = vdwg.mxu0
    %v303 = vmax.f32 %v297, 0.0
    %v304 = vmax.f32 %v300, 0.0
    %v305 = vpack.c.bf16 %v304, %v303
    %v306 = vld [vmem:[#allocation6] sm:$0xf]
    %v307 = vld [vmem:[#allocation6 + $0x4] sm:$0xf]
    %v308 = vld [vmem:[#allocation6 + $0x8] sm:$0xf]
    %v309 = vld [vmem:[#allocation6 + $0xc] sm:$0xf]
    %v310 = vld [vmem:[#allocation6 + $0x10] sm:$0xf]
    %v311 = vld [vmem:[#allocation6 + $0x14] sm:$0xf]
    %v312 = vld [vmem:[#allocation6 + $0x18] sm:$0xf]
    %v313 = vld [vmem:[#allocation6 + $0x1c] sm:$0xf]
    %v314 = vld [vmem:[#allocation6 + $0x20] sm:$0xf]
    %v315 = vld [vmem:[#allocation6 + $0x24] sm:$0xf]
    %v316 = vld [vmem:[#allocation6 + $0x28] sm:$0xf]
    %v317 = vld [vmem:[#allocation6 + $0x2c] sm:$0xf]
    %v318 = vld [vmem:[#allocation6 + $0x30] sm:$0xf]
    %v319 = vld [vmem:[#allocation6 + $0x34] sm:$0xf]
    %v320 = vld [vmem:[#allocation6 + $0x38] sm:$0xf]
    %v321 = vld [vmem:[#allocation6 + $0x3c] sm:$0xf]
    %v322 = vld [vmem:[%s6] sm:$0x1]
    %v324 = vlaneseq
    %v325 = vshrl.u32 %v324, 7
    %v326 = vsub.s32 0, %v325
    %v327 = vrot.slane %v322, %v326
    %v345 = vunpack.c.l.b16 %v306
    %v346 = vunpack.c.l.b16 %v307
    %v347 = vunpack.c.l.b16 %v308
    %v348 = vunpack.c.l.b16 %v309
    %v349 = vunpack.c.l.b16 %v310
    %v350 = vunpack.c.l.b16 %v311
    %v351 = vunpack.c.l.b16 %v312
    %v352 = vunpack.c.l.b16 %v313
    %v353 = vunpack.c.l.b16 %v314
    %v354 = vunpack.c.l.b16 %v315
    %v355 = vunpack.c.l.b16 %v316
    %v356 = vunpack.c.l.b16 %v317
    %v357 = vunpack.c.l.b16 %v318
    %v358 = vunpack.c.l.b16 %v319
    %v359 = vunpack.c.l.b16 %v320
    %v360 = vunpack.c.l.b16 %v321
    %v361 = vpack.c.b16 %v346, %v345
    %v362 = vpack.c.b16 %v348, %v347
    %v363 = vpack.c.b16 %v350, %v349
    %v364 = vpack.c.b16 %v352, %v351
    %v365 = vpack.c.b16 %v354, %v353
    %v366 = vpack.c.b16 %v356, %v355
    %v367 = vpack.c.b16 %v358, %v357
    %v368 = vpack.c.b16 %v360, %v359
    %377 = vmatprep.subr.bf16.mxu0 0
    %378 = vmatpush1.bf16.msra.mxu0 %v368
    %379 = vmatprep.subr.bf16.mxu0 0
    %380 = vmatpush1.bf16.msra.mxu0 %v367
    %381 = vmatprep.subr.bf16.mxu0 0
    %382 = vmatpush1.bf16.msra.mxu0 %v366
    %383 = vmatprep.subr.bf16.mxu0 0
    %384 = vmatpush1.bf16.msra.mxu0 %v365
    %385 = vmatprep.subr.bf16.mxu0 0
    %386 = vmatpush1.bf16.msra.mxu0 %v364
    %387 = vmatprep.subr.bf16.mxu0 0
    %388 = vmatpush1.bf16.msra.mxu0 %v363
    %389 = vmatprep.subr.bf16.mxu0 0
    %390 = vmatpush1.bf16.msra.mxu0 %v362
    %391 = vmatprep.subr.bf16.mxu0 0
    %392 = vmatpush1.bf16.msra.mxu0 %v361
    %393 = vmatprep.subr.bf16.mxu0 0
    %394 = vmatpush2.bf16.msra.mxu0 0
    %395 = vmatprep.subr.bf16.mxu0 0
    %396 = vmatpush2.bf16.msra.mxu0 0
    %397 = vmatprep.subr.bf16.mxu0 0
    %398 = vmatpush2.bf16.msra.mxu0 0
    %399 = vmatprep.subr.bf16.mxu0 0
    %400 = vmatpush2.bf16.msra.mxu0 0
    %401 = vmatprep.subr.bf16.mxu0 0
    %402 = vmatpush2.bf16.msra.mxu0 0
    %403 = vmatprep.subr.bf16.mxu0 0
    %404 = vmatpush2.bf16.msra.mxu0 0
    %405 = vmatprep.subr.bf16.mxu0 0
    %406 = vmatpush2.bf16.msra.mxu0 0
    %407 = vmatprep.subr.bf16.mxu0 0
    %408 = vmatpush2.bf16.msra.mxu0 0
    %409 = vmatprep.mubr.bf16.mxu0 0
    %410 = vmatmul.mubr.bf16.gmra.mxu0 %v305
    %v411 = vpop.f32.mrf.mxu0
    %v412 = vadd.f32 %v327, %v411
    %v413 = vpop.f32.mrf.mxu0
    %v414 = vpop.f32.mrf.mxu0
    %v415 = vadd.f32 %v327, %v414
    %v416 = vpop.f32.mrf.mxu0
    %417 = vdwg.mxu0
    %v418 = vadd.f32 %v412, %v188
    %v419 = vadd.f32 %v415, %v189
    %v420 = vmax.f32 %v418, 0.0
    %v421 = vmax.f32 %v419, 0.0
    %v422 = vpack.c.bf16 %v421, %v420
    %s423 = scalar_lea.vmem [#allocation4], 64
    %v424 = vld [vmem:[%s423] sm:$0xf]
    %v425 = vld [vmem:[%s423 + $0x4] sm:$0xf]
    %v426 = vld [vmem:[%s423 + $0x8] sm:$0xf]
    %v427 = vld [vmem:[%s423 + $0xc] sm:$0xf]
    %v428 = vld [vmem:[%s423 + $0x10] sm:$0xf]
    %v429 = vld [vmem:[%s423 + $0x14] sm:$0xf]
    %v430 = vld [vmem:[%s423 + $0x18] sm:$0xf]
    %v431 = vld [vmem:[%s423 + $0x1c] sm:$0xf]
    %v432 = vld [vmem:[%s423 + $0x20] sm:$0xf]
    %v433 = vld [vmem:[%s423 + $0x24] sm:$0xf]
    %v434 = vld [vmem:[%s423 + $0x28] sm:$0xf]
    %v435 = vld [vmem:[%s423 + $0x2c] sm:$0xf]
    %v436 = vld [vmem:[%s423 + $0x30] sm:$0xf]
    %v437 = vld [vmem:[%s423 + $0x34] sm:$0xf]
    %v438 = vld [vmem:[%s423 + $0x38] sm:$0xf]
    %v439 = vld [vmem:[%s423 + $0x3c] sm:$0xf]
    %s440 = scalar_lea.vmem %s4, 1
    %v441 = vld [vmem:[%s440] sm:$0x1]
    %v443 = vlaneseq
    %v444 = vshrl.u32 %v443, 7
    %v445 = vsub.s32 0, %v444
    %v446 = vrot.slane %v441, %v445
    %v464 = vunpack.c.l.b16 %v424
    %v465 = vunpack.c.l.b16 %v425
    %v466 = vunpack.c.l.b16 %v426
    %v467 = vunpack.c.l.b16 %v427
    %v468 = vunpack.c.l.b16 %v428
    %v469 = vunpack.c.l.b16 %v429
    %v470 = vunpack.c.l.b16 %v430
    %v471 = vunpack.c.l.b16 %v431
    %v472 = vunpack.c.l.b16 %v432
    %v473 = vunpack.c.l.b16 %v433
    %v474 = vunpack.c.l.b16 %v434
    %v475 = vunpack.c.l.b16 %v435
    %v476 = vunpack.c.l.b16 %v436
    %v477 = vunpack.c.l.b16 %v437
    %v478 = vunpack.c.l.b16 %v438
    %v479 = vunpack.c.l.b16 %v439
    %v480 = vpack.c.b16 %v465, %v464
    %v481 = vpack.c.b16 %v467, %v466
    %v482 = vpack.c.b16 %v469, %v468
    %v483 = vpack.c.b16 %v471, %v470
    %v484 = vpack.c.b16 %v473, %v472
    %v485 = vpack.c.b16 %v475, %v474
    %v486 = vpack.c.b16 %v477, %v476
    %v487 = vpack.c.b16 %v479, %v478
    %496 = vmatprep.subr.bf16.mxu0 0
    %497 = vmatpush1.bf16.msra.mxu0 %v487
    %498 = vmatprep.subr.bf16.mxu0 0
    %499 = vmatpush1.bf16.msra.mxu0 %v486
    %500 = vmatprep.subr.bf16.mxu0 0
    %501 = vmatpush1.bf16.msra.mxu0 %v485
    %502 = vmatprep.subr.bf16.mxu0 0
    %503 = vmatpush1.bf16.msra.mxu0 %v484
    %504 = vmatprep.subr.bf16.mxu0 0
    %505 = vmatpush1.bf16.msra.mxu0 %v483
    %506 = vmatprep.subr.bf16.mxu0 0
    %507 = vmatpush1.bf16.msra.mxu0 %v482
    %508 = vmatprep.subr.bf16.mxu0 0
    %509 = vmatpush1.bf16.msra.mxu0 %v481
    %510 = vmatprep.subr.bf16.mxu0 0
    %511 = vmatpush1.bf16.msra.mxu0 %v480
    %512 = vmatprep.subr.bf16.mxu0 0
    %513 = vmatpush2.bf16.msra.mxu0 0
    %514 = vmatprep.subr.bf16.mxu0 0
    %515 = vmatpush2.bf16.msra.mxu0 0
    %516 = vmatprep.subr.bf16.mxu0 0
    %517 = vmatpush2.bf16.msra.mxu0 0
    %518 = vmatprep.subr.bf16.mxu0 0
    %519 = vmatpush2.bf16.msra.mxu0 0
    %520 = vmatprep.subr.bf16.mxu0 0
    %521 = vmatpush2.bf16.msra.mxu0 0
    %522 = vmatprep.subr.bf16.mxu0 0
    %523 = vmatpush2.bf16.msra.mxu0 0
    %524 = vmatprep.subr.bf16.mxu0 0
    %525 = vmatpush2.bf16.msra.mxu0 0
    %526 = vmatprep.subr.bf16.mxu0 0
    %527 = vmatpush2.bf16.msra.mxu0 0
    %528 = vmatprep.mubr.bf16.mxu0 0
    %529 = vmatmul.mubr.bf16.gmra.mxu0 %v422
    %v530 = vpop.f32.mrf.mxu0
    %v531 = vadd.f32 %v446, %v530
    %v532 = vpop.f32.mrf.mxu0
    %v533 = vpop.f32.mrf.mxu0
    %v534 = vadd.f32 %v446, %v533
    %v535 = vpop.f32.mrf.mxu0
    %536 = vdwg.mxu0
    %v537 = vmax.f32 %v531, 0.0
    %v538 = vmax.f32 %v534, 0.0
    %v539 = vpack.c.bf16 %v538, %v537
    %s540 = scalar_lea.vmem [#allocation6], 64
    %v541 = vld [vmem:[%s540] sm:$0xf]
    %v542 = vld [vmem:[%s540 + $0x4] sm:$0xf]
    %v543 = vld [vmem:[%s540 + $0x8] sm:$0xf]
    %v544 = vld [vmem:[%s540 + $0xc] sm:$0xf]
    %v545 = vld [vmem:[%s540 + $0x10] sm:$0xf]
    %v546 = vld [vmem:[%s540 + $0x14] sm:$0xf]
    %v547 = vld [vmem:[%s540 + $0x18] sm:$0xf]
    %v548 = vld [vmem:[%s540 + $0x1c] sm:$0xf]
    %v549 = vld [vmem:[%s540 + $0x20] sm:$0xf]
    %v550 = vld [vmem:[%s540 + $0x24] sm:$0xf]
    %v551 = vld [vmem:[%s540 + $0x28] sm:$0xf]
    %v552 = vld [vmem:[%s540 + $0x2c] sm:$0xf]
    %v553 = vld [vmem:[%s540 + $0x30] sm:$0xf]
    %v554 = vld [vmem:[%s540 + $0x34] sm:$0xf]
    %v555 = vld [vmem:[%s540 + $0x38] sm:$0xf]
    %v556 = vld [vmem:[%s540 + $0x3c] sm:$0xf]
    %s557 = scalar_lea.vmem %s6, 1
    %v558 = vld [vmem:[%s557] sm:$0x1]
    %v560 = vlaneseq
    %v561 = vshrl.u32 %v560, 7
    %v562 = vsub.s32 0, %v561
    %v563 = vrot.slane %v558, %v562
    %v581 = vunpack.c.l.b16 %v541
    %v582 = vunpack.c.l.b16 %v542
    %v583 = vunpack.c.l.b16 %v543
    %v584 = vunpack.c.l.b16 %v544
    %v585 = vunpack.c.l.b16 %v545
    %v586 = vunpack.c.l.b16 %v546
    %v587 = vunpack.c.l.b16 %v547
    %v588 = vunpack.c.l.b16 %v548
    %v589 = vunpack.c.l.b16 %v549
    %v590 = vunpack.c.l.b16 %v550
    %v591 = vunpack.c.l.b16 %v551
    %v592 = vunpack.c.l.b16 %v552
    %v593 = vunpack.c.l.b16 %v553
    %v594 = vunpack.c.l.b16 %v554
    %v595 = vunpack.c.l.b16 %v555
    %v596 = vunpack.c.l.b16 %v556
    %v597 = vpack.c.b16 %v582, %v581
    %v598 = vpack.c.b16 %v584, %v583
    %v599 = vpack.c.b16 %v586, %v585
    %v600 = vpack.c.b16 %v588, %v587
    %v601 = vpack.c.b16 %v590, %v589
    %v602 = vpack.c.b16 %v592, %v591
    %v603 = vpack.c.b16 %v594, %v593
    %v604 = vpack.c.b16 %v596, %v595
    %613 = vmatprep.subr.bf16.mxu0 0
    %614 = vmatpush1.bf16.msra.mxu0 %v604
    %615 = vmatprep.subr.bf16.mxu0 0
    %616 = vmatpush1.bf16.msra.mxu0 %v603
    %617 = vmatprep.subr.bf16.mxu0 0
    %618 = vmatpush1.bf16.msra.mxu0 %v602
    %619 = vmatprep.subr.bf16.mxu0 0
    %620 = vmatpush1.bf16.msra.mxu0 %v601
    %621 = vmatprep.subr.bf16.mxu0 0
    %622 = vmatpush1.bf16.msra.mxu0 %v600
    %623 = vmatprep.subr.bf16.mxu0 0
    %624 = vmatpush1.bf16.msra.mxu0 %v599
    %625 = vmatprep.subr.bf16.mxu0 0
    %626 = vmatpush1.bf16.msra.mxu0 %v598
    %627 = vmatprep.subr.bf16.mxu0 0
    %628 = vmatpush1.bf16.msra.mxu0 %v597
    %629 = vmatprep.subr.bf16.mxu0 0
    %630 = vmatpush2.bf16.msra.mxu0 0
    %631 = vmatprep.subr.bf16.mxu0 0
    %632 = vmatpush2.bf16.msra.mxu0 0
    %633 = vmatprep.subr.bf16.mxu0 0
    %634 = vmatpush2.bf16.msra.mxu0 0
    %635 = vmatprep.subr.bf16.mxu0 0
    %636 = vmatpush2.bf16.msra.mxu0 0
    %637 = vmatprep.subr.bf16.mxu0 0
    %638 = vmatpush2.bf16.msra.mxu0 0
    %639 = vmatprep.subr.bf16.mxu0 0
    %640 = vmatpush2.bf16.msra.mxu0 0
    %641 = vmatprep.subr.bf16.mxu0 0
    %642 = vmatpush2.bf16.msra.mxu0 0
    %643 = vmatprep.subr.bf16.mxu0 0
    %644 = vmatpush2.bf16.msra.mxu0 0
    %645 = vmatprep.mubr.bf16.mxu0 0
    %646 = vmatmul.mubr.bf16.gmra.mxu0 %v539
    %v647 = vpop.f32.mrf.mxu0
    %v648 = vadd.f32 %v563, %v647
    %v649 = vpop.f32.mrf.mxu0
    %v650 = vpop.f32.mrf.mxu0
    %v651 = vadd.f32 %v563, %v650
    %v652 = vpop.f32.mrf.mxu0
    %653 = vdwg.mxu0
    %v654 = vadd.f32 %v648, %v420
    %v655 = vadd.f32 %v651, %v421
    %v656 = vmax.f32 %v654, 0.0
    %v657 = vmax.f32 %v655, 0.0
    %658 = vst [vmem:[%s7] sm:$0xff] %v656
    %659 = vst [vmem:[%s7 + $0x8] sm:$0xff] %v657
    // Predicated region
    $region42: #{net1_forward.1} parent=1 // pred_check
      _
    $region43: #{net1_forward.1} parent=1 // pred_check_branch
      %661 = sbr.rel (0) target = $region45
    $region44: #{net1_forward.1} parent=1 // pred_region
      _
    $region45: #{net1_forward.1} parent=1 // pred_fallthru
      _
    // Predicated region
    $region46: #{net1_forward.1} parent=1 // pred_check
      _
    $region47: #{net1_forward.1} parent=1 // pred_check_branch
      %663 = sbr.rel (0) target = $region49
    $region48: #{net1_forward.1} parent=1 // pred_region
      _
    $region49: #{net1_forward.1} parent=1 // pred_fallthru
      _
    %664 = vsyncpa [#allocation3], 1
    %665 = vsyncpa [#allocation5], 1

</llo_original>
